<compile_context>
chip_gen: v7x
topology: tpu7x:2x2x1
jax: 0.10.0
libtpu: 0.0.40
codegen_flags: <defaults>
</compile_context>

<pallas_src>
import functools

import jax
import jax.numpy as jnp
from jax.experimental import pallas as pl
from jax.experimental.pallas import tpu as pltpu

EPS = 1e-6      # eps used by both GeM and Normalize (module defaults)
POWER = 2       # Normalize power (module default)


def _pool_and_norm_kernel(p_ref, x_ref, o_ref, acc_ref, *, inv_hw):
    # p_ref:   SMEM (1,) f32        — GeM exponent parameter
    # x_ref:   VMEM (tB, C, tHW) f32 — current spatial chunk
    # o_ref:   VMEM (tB, C) f32      — final normalized descriptor (resident over k)
    # acc_ref: VMEM (tB, C) f32      — running sum of clamp(x, eps)**p
    k = pl.program_id(1)

    @pl.when(k == 0)
    def _():
        acc_ref[...] = jnp.zeros_like(acc_ref)

    p = p_ref[0]
    x = x_ref[...]                                   # (tB, C, tHW)
    xc = jnp.maximum(x, EPS)                         # clamp(min=eps)  -> strictly > 0
    xp = jnp.exp(p * jnp.log(xc))                    # xc ** p  (safe: xc > 0)
    acc_ref[...] += jnp.sum(xp, axis=-1)             # accumulate over spatial chunk

    @pl.when(k == pl.num_programs(1) - 1)
    def _():
        pooled = acc_ref[...] * inv_hw               # avg_pool2d over full spatial, (tB, C)
        g = jnp.exp(jnp.log(pooled) / p)             # pooled ** (1/p)   (pooled > 0)
        # Normalize (power=2): g / (||g||_2 along C + eps)
        nrm = jnp.sqrt(jnp.sum(g * g, axis=1, keepdims=True))
        o_ref[...] = g / (nrm + EPS)


def pool_and_norm(x, p_param, *, block_b=None, block_hw=None):
    """x: (B, C, H, W) float, p_param: (1,) float GeM exponent.  Returns (B, C) f32."""
    B, C, H, W = x.shape
    HW = H * W
    xf = x.reshape(B, C, HW).astype(jnp.float32)
    p_param = p_param.reshape(-1).astype(jnp.float32)

    # Batch tile: second-to-last dim of the output block -> multiple of 8 or full B.
    if block_b is None:
        block_b = 8 if B % 8 == 0 else B
    tB = block_b

    # Spatial tile: multiple of 128 dividing HW (or the full extent if not divisible),
    # shrunk to keep one buffered input tile around <= ~4 MiB.
    if block_hw is None:
        block_hw = HW
        if HW % 128 == 0:
            budget = 4 * 1024 * 1024
            while block_hw % 256 == 0 and tB * C * block_hw * 4 > budget:
                block_hw //= 2
    tHW = block_hw
    assert B % tB == 0 and HW % tHW == 0

    grid = (B // tB, HW // tHW)

    cost = pl.CostEstimate(
        flops=4 * B * C * HW,                 # clamp + mul + add + epilogue-ish
        transcendentals=2 * B * C * HW,       # log + exp per element
        bytes_accessed=4 * B * C * HW + 4 * B * C,
    )

    kernel = functools.partial(_pool_and_norm_kernel, inv_hw=1.0 / float(HW))

    return pl.pallas_call(
        kernel,
        out_shape=jax.ShapeDtypeStruct((B, C), jnp.float32),
        grid_spec=pltpu.PrefetchScalarGridSpec(
            num_scalar_prefetch=0,
            grid=grid,
            in_specs=[
                pl.BlockSpec(memory_space=pltpu.SMEM),                  # p (scalar param)
                pl.BlockSpec((tB, C, tHW), lambda b, k: (b, 0, k)),     # x chunk
            ],
            out_specs=pl.BlockSpec((tB, C), lambda b, k: (b, 0)),       # resident across k
            scratch_shapes=[pltpu.VMEM((tB, C), jnp.float32)],
        ),
        compiler_params=pltpu.CompilerParams(
            dimension_semantics=("parallel", "arbitrary")),
        cost_estimate=cost,
    )(p_param, xf)


def _reference(x, p_param):
    # Pure-JAX reference mirroring the PyTorch forward.
    p = p_param[0]
    xc = jnp.maximum(x, EPS)                           # clamp(min=eps)
    pooled = jnp.mean(xc ** p, axis=(-2, -1))          # (B, C)
    g = pooled ** (1.0 / p)
    nrm = jnp.sum(g ** POWER, axis=1, keepdims=True) ** (1.0 / POWER)
    return g / (nrm + EPS)


if __name__ == "__main__":
    key = jax.random.PRNGKey(0)
    B, C, H, W = 2, 4, 16, 16
    x = jax.random.normal(key, (B, C, H, W), dtype=jnp.float32)

    # Deterministic parameter init: GeM p = 3.0 (nn.Parameter(torch.ones(1) * 3))
    p_param = jnp.ones((1,), dtype=jnp.float32) * 3.0

    # block_hw=128 -> 2 spatial chunks, exercising the streaming-reduction path.
    out = pool_and_norm(x, p_param, block_hw=128)
    out = jax.block_until_ready(out)

    ref = _reference(x, p_param)
    assert out.shape == (B, C)
    assert jnp.allclose(out, ref, atol=1e-5, rtol=1e-5), "mismatch vs reference"

    print("KERNEL_OK")
</pallas_src>

<mosaic_0001>
module attributes {stable_mosaic.version = 11 : i64} {
  func.func @_pool_and_norm_kernel(%arg0: i32, %arg1: i32, %arg2: memref<1xf32, #tpu.memory_space<smem>>, %arg3: memref<2x4x128xf32, #tpu.memory_space<vmem>>, %arg4: memref<2x4xf32, #tpu.memory_space<vmem>>, %arg5: memref<2x4xf32, #tpu.memory_space<vmem>>) attributes {dimension_semantics = [#tpu.dimension_semantics<parallel>, #tpu.dimension_semantics<arbitrary>], iteration_bounds = array<i64: 1, 2>, scalar_prefetch = 0 : i64, scratch_operands = 1 : i64, tpu.core_type = #tpu.core_type<tc>, window_params = [{transform_indices = @transform_0, window_bounds = array<i64: 1>}, {transform_indices = @transform_1, window_bounds = array<i64: 2, 4, 128>}, {transform_indices = @transform_2, window_bounds = array<i64: 2, 4>}]} {
    %c0_i32 = arith.constant 0 : i32
    %0 = arith.cmpi eq, %arg1, %c0_i32 : i32
    %1 = arith.extui %0 : i1 to i32
    %c0_i32_0 = arith.constant 0 : i32
    %2 = arith.cmpi ne, %1, %c0_i32_0 : i32
    scf.if %2 {
      %cst_10 = arith.constant 0.000000e+00 : f32
      %18 = vector.broadcast %cst_10 : f32 to vector<2x4xf32>
      %c0_11 = arith.constant 0 : index
      %c0_12 = arith.constant 0 : index
      %19 = vector.load %arg5[%c0_11, %c0_12] : memref<2x4xf32, #tpu.memory_space<vmem>>, vector<2x4xf32>
      tpu.vector_store %arg5[%c0_11, %c0_12], %18 {strides = array<i32>} : memref<2x4xf32, #tpu.memory_space<vmem>>, vector<2x4xf32>,
    } else {
    }
    %c0 = arith.constant 0 : index
    %3 = memref.load %arg2[%c0] : memref<1xf32, #tpu.memory_space<smem>>
    %c0_1 = arith.constant 0 : index
    %c0_2 = arith.constant 0 : index
    %c0_3 = arith.constant 0 : index
    %4 = vector.load %arg3[%c0_1, %c0_2, %c0_3] : memref<2x4x128xf32, #tpu.memory_space<vmem>>, vector<2x4x128xf32>
    %cst = arith.constant 9.99999997E-7 : f32
    %5 = vector.broadcast %cst : f32 to vector<2x4x128xf32>
    %6 = arith.maximumf %4, %5 : vector<2x4x128xf32>
    %7 = math.log %6 : vector<2x4x128xf32>
    %8 = vector.broadcast %3 : f32 to vector<2x4x128xf32>
    %9 = arith.mulf %8, %7 : vector<2x4x128xf32>
    %10 = math.exp %9 : vector<2x4x128xf32>
    %c0_4 = arith.constant 0 : index
    %c0_5 = arith.constant 0 : index
    %11 = vector.load %arg5[%c0_4, %c0_5] : memref<2x4xf32, #tpu.memory_space<vmem>>, vector<2x4xf32>
    %cst_6 = arith.constant dense<0.000000e+00> : vector<2x4xf32>
    %12 = vector.multi_reduction <add>, %10, %cst_6 [2] : vector<2x4x128xf32> to vector<2x4xf32>
    %13 = arith.addf %11, %12 : vector<2x4xf32>
    %c0_7 = arith.constant 0 : index
    %c0_8 = arith.constant 0 : index
    %14 = vector.load %arg5[%c0_7, %c0_8] : memref<2x4xf32, #tpu.memory_space<vmem>>, vector<2x4xf32>
    tpu.vector_store %arg5[%c0_7, %c0_8], %13 {strides = array<i32>} : memref<2x4xf32, #tpu.memory_space<vmem>>, vector<2x4xf32>,
    %c1_i32 = arith.constant 1 : i32
    %15 = arith.cmpi eq, %arg1, %c1_i32 : i32
    %16 = arith.extui %15 : i1 to i32
    %c0_i32_9 = arith.constant 0 : i32
    %17 = arith.cmpi ne, %16, %c0_i32_9 : i32
    scf.if %17 {
      %c0_10 = arith.constant 0 : index
      %c0_11 = arith.constant 0 : index
      %18 = vector.load %arg5[%c0_10, %c0_11] : memref<2x4xf32, #tpu.memory_space<vmem>>, vector<2x4xf32>
      %cst_12 = arith.constant 3.906250e-03 : f32
      %19 = vector.broadcast %cst_12 : f32 to vector<2x4xf32>
      %20 = arith.mulf %18, %19 : vector<2x4xf32>
      %21 = math.log %20 : vector<2x4xf32>
      %22 = vector.broadcast %3 : f32 to vector<2x4xf32>
      %23 = arith.divf %21, %22 : vector<2x4xf32>
      %24 = math.exp %23 : vector<2x4xf32>
      %25 = arith.mulf %24, %24 : vector<2x4xf32>
      %cst_13 = arith.constant dense<0.000000e+00> : vector<2xf32>
      %26 = vector.multi_reduction <add>, %25, %cst_13 [1] : vector<2x4xf32> to vector<2xf32>
      %27 = vector.shape_cast %26 : vector<2xf32> to vector<2x1xf32>
      %28 = math.sqrt %27 : vector<2x1xf32>
      %cst_14 = arith.constant 9.99999997E-7 : f32
      %29 = vector.broadcast %cst_14 : f32 to vector<2x1xf32>
      %30 = arith.addf %28, %29 : vector<2x1xf32>
      %31 = vector.broadcast %30 : vector<2x1xf32> to vector<2x4xf32>
      %32 = arith.divf %24, %31 : vector<2x4xf32>
      %c0_15 = arith.constant 0 : index
      %c0_16 = arith.constant 0 : index
      %33 = vector.load %arg4[%c0_15, %c0_16] : memref<2x4xf32, #tpu.memory_space<vmem>>, vector<2x4xf32>
      tpu.vector_store %arg4[%c0_15, %c0_16], %32 {strides = array<i32>} : memref<2x4xf32, #tpu.memory_space<vmem>>, vector<2x4xf32>,
    } else {
    }
    return
  }
  func.func @transform_0(%arg0: i32, %arg1: i32) -> i32 {
    %c0_i32 = arith.constant 0 : i32
    %c0_i32_0 = arith.constant 0 : i32
    return %c0_i32 : i32
  }
  func.func @transform_1(%arg0: i32, %arg1: i32) -> (i32, i32, i32) {
    %c0_i32 = arith.constant 0 : i32
    %c0_i32_0 = arith.constant 0 : i32
    return %arg0, %c0_i32, %arg1 : i32, i32, i32
  }
  func.func @transform_2(%arg0: i32, %arg1: i32) -> (i32, i32) {
    %c0_i32 = arith.constant 0 : i32
    %c0_i32_0 = arith.constant 0 : i32
    return %arg0, %c0_i32 : i32, i32
  }
}

</mosaic_0001>

<llo_original>
// kernel: tpu_custom_call.1
$region0: #{tpu_custom_call.1}
  #allocation0 [shape = 'u32[]', space=smem, size = 0x4, offset = 0x4, fixed_abs, tag = 'smem constant byte address 0x4 - core index']
  #allocation1 [shape = 'u32[144,128]{1,0:T(1,128)}', space=vmem, size = 0x12000, scoped, tag = 'internal scratch']
  #allocation2 [shape = 'f32[2,4]{1,0:T(2,128)}', space=vmem, size = 0x400, scoped, tag = 'scratch operand']
  #allocation3 [shape = 'f32[1]{0:T(128)S(6)}', space=smem, size = 0x200, scoped, tag = 'scoped memory for tpu_custom_call.1']
  %s0 = inlined_call_operand.<no memory space> [shape: f32[1], index: 0, kind: input, shape index: {}]
  %s1 = inlined_call_operand.hbm [shape: f32[2,4,256], index: 1, kind: input, shape index: {}]
  %s2 = inlined_call_operand.hbm [shape: f32[2,4], index: 2, kind: output, shape index: {}]
  %s3 = sld [smem:[#allocation0]]
  $region53: #{tpu_custom_call.1} parent=0
    _
  %s5 = ssub.s32 1, %s3
  %s6 = scalar_select 0, %s5, %s3
  %7 = sst [smem:[#allocation3]] %s0
  $region1: #{tpu_custom_call.1} parent=0
    #allocation4 [shape = 'u8[8192]{0}', space=vmem, size = 0x2000, scoped, tag = 'input window, operand 1']
    #allocation5 [shape = 's32[2]{0}', space=sflag, size = 0x8, scoped, tag = 'scoped memory for tpu_custom_call.1']
    #allocation6 [shape = 's32[2]{0}', space=sflag, size = 0x8, scoped, tag = 'scoped memory for tpu_custom_call.1']
    #allocation7 [shape = 'u8[1024]{0}', space=vmem, size = 0x400, scoped, tag = 'output window, operand 0, single buffered']
    %8 = vsyncpa [#allocation5], 0
    %s9 = scalar_lea.sflag [#allocation5], 1
    %10 = vsyncpa %s9, 0
    %11 = vsyncpa [#allocation6], 0
    loop: start=0, step=1, limit=4
    $region2: #{tpu_custom_call.1} parent=1 // loop_pre_header
      _
    $region3: #{tpu_custom_call.1} parent=1 // loop_header
      %s13 = sphi 0, %s17
      %p14 = scmp.ge.s32.totalorder %s13, 4
      %s20 = sphi 0, %s32
      %s21 = sphi 0, %s28
      %s22 = sphi 0, %s20
      %s23 = sphi 0, %s21
      %s24 = sphi 0, %s22
      %s25 = sphi 0, %s23
      %s33 = sphi 0, %s33
      %s35 = sphi 0, %s33
      %s36 = sphi 0, %s35
      %s50 = sphi 0, %s36
      %s58 = sphi 0, %s60
      %s61 = sphi 0, %s58
      %s62 = sphi 0, %s61
      %s78 = sphi 0, %s62
      %s84 = sphi 0, %s86
      %s87 = sphi 0, %s84
      %s88 = sphi 0, %s87
      %s104 = sphi 0, %s88
    $region4: #{tpu_custom_call.1} parent=1 // loop_header_branch
      %16 = sbr.rel (%p14) target = $region8
    $region5: #{tpu_custom_call.1} parent=1 // loop_body
      %s18 = ssub.s32 %s13, 1
      %s19 = ssub.s32 %s13, 2
      %s26 = sadd.s32 1, %s21
      %p27 = scmp.ge.s32.totalorder %s26, 2
      %s28 = scalar_select %p27, 0, %s26
      %s29 = sadd.s32 1, %s20
      %s30 = scalar_select %p27, %s29, %s20
      %p31 = scmp.ge.s32.totalorder %s30, 1
      %s32 = scalar_select %p31, 0, %s30
      %s34 = sadd.s32 %s33, 1
      %p37 = scmp.eq.s32.totalorder %s13, 1
      %p38 = scmp.ne.s32.totalorder %s33, %s35
      %p39 = scmp.eq.s32.totalorder %s13, 0
      %p40 = por %p38, %p39
      %p41 = scmp.ne.s32.totalorder %s33, %s35
      %p42 = scmp.eq.s32.totalorder %s18, 1
      %p43 = por %p41, %p42
      %p44 = scmp.ne.s32.totalorder %s35, %s36
      %p45 = scmp.eq.s32.totalorder %s18, 0
      %p46 = por %p44, %p45
      %p47 = scmp.ne.s32.totalorder %s35, %s36
      %p48 = scmp.eq.s32.totalorder %s19, 1
      %p49 = por %p47, %p48
      %p51 = scmp.ne.s32.totalorder %s36, %s50
      %p52 = scmp.eq.s32.totalorder %s19, 0
      %p53 = por %p51, %p52
      %s54 = ssub.s32 %s20, %s32
      %s55 = ssub.s32 %s21, %s28
      %s56 = sor.u32 %s54, %s55
      %p57 = scmp.eq.s32.totalorder %s56, 0
      %s59 = sadd.s32 %s58, 1
      %s60 = scalar_select %p57, %s58, %s59
      %p63 = pneg %p57
      %p64 = scmp.eq.s32.totalorder %s13, 1
      %p65 = por %p63, %p64
      %p66 = scmp.ne.s32.totalorder %s58, %s61
      %p67 = scmp.eq.s32.totalorder %s13, 0
      %p68 = por %p66, %p67
      %p69 = scmp.ne.s32.totalorder %s58, %s61
      %p70 = scmp.eq.s32.totalorder %s18, 1
      %p71 = por %p69, %p70
      %p72 = scmp.ne.s32.totalorder %s61, %s62
      %p73 = scmp.eq.s32.totalorder %s18, 0
      %p74 = por %p72, %p73
      %p75 = scmp.ne.s32.totalorder %s61, %s62
      %p76 = scmp.eq.s32.totalorder %s19, 1
      %p77 = por %p75, %p76
      %p79 = scmp.ne.s32.totalorder %s62, %s78
      %p80 = scmp.eq.s32.totalorder %s19, 0
      %p81 = por %p79, %p80
      %s82 = ssub.s32 %s20, %s32
      %p83 = scmp.eq.s32.totalorder %s82, 0
      %s85 = sadd.s32 %s84, 1
      %s86 = scalar_select %p83, %s84, %s85
      %p89 = pneg %p83
      %p90 = scmp.eq.s32.totalorder %s13, 1
      %p91 = por %p89, %p90
      %p92 = scmp.ne.s32.totalorder %s84, %s87
      %p93 = scmp.eq.s32.totalorder %s13, 0
      %p94 = por %p92, %p93
      %p95 = scmp.ne.s32.totalorder %s84, %s87
      %p96 = scmp.eq.s32.totalorder %s18, 1
      %p97 = por %p95, %p96
      %p98 = scmp.ne.s32.totalorder %s87, %s88
      %p99 = scmp.eq.s32.totalorder %s18, 0
      %p100 = por %p98, %p99
      %p101 = scmp.ne.s32.totalorder %s87, %s88
      %p102 = scmp.eq.s32.totalorder %s19, 1
      %p103 = por %p101, %p102
      %p105 = scmp.ne.s32.totalorder %s88, %s104
      %p106 = scmp.eq.s32.totalorder %s19, 0
      %p107 = por %p105, %p106
      %p108 = scmp.le.s32.totalorder 1, %s13
      %p109 = scmp.lt.s32.totalorder %s13, 3
      %p110 = pnand %p108, %p109
      %p111 = pneg %p110
      // Predicated region
      $region9: #{tpu_custom_call.1} parent=5 // pred_check
        _
      $region10: #{tpu_custom_call.1} parent=5 // pred_check_branch
        %113 = sbr.rel (%p110) target = $region12
      $region11: #{tpu_custom_call.1} parent=5 // pred_region
        %s114 = ssub.s32 %s13, 1
        // Predicated region
        $region13: #{tpu_custom_call.1} parent=11 // pred_check
          %p115 = pneg %p46
        $region14: #{tpu_custom_call.1} parent=11 // pred_check_branch
          %117 = sbr.rel (%p115) target = $region16
        $region15: #{tpu_custom_call.1} parent=11 // pred_region
          _
        $region16: #{tpu_custom_call.1} parent=11 // pred_fallthru
          _
      $region12: #{tpu_custom_call.1} parent=5 // pred_fallthru
        _
      %p118 = scmp.lt.s32.totalorder %s13, 2
      // Predicated region
      $region17: #{tpu_custom_call.1} parent=5 // pred_check
        %p119 = pneg %p118
      $region18: #{tpu_custom_call.1} parent=5 // pred_check_branch
        %121 = sbr.rel (%p119) target = $region20
      $region19: #{tpu_custom_call.1} parent=5 // pred_region
        // Predicated region
        $region21: #{tpu_custom_call.1} parent=19 // pred_check
          %p122 = pneg %p68
        $region22: #{tpu_custom_call.1} parent=19 // pred_check_branch
          %124 = sbr.rel (%p122) target = $region24
        $region23: #{tpu_custom_call.1} parent=19 // pred_region
          %s125 = sand.u32 %s58, 1
          %s126 = scalar_lea.sflag [#allocation5], %s125
          %s127 = sand.u32 %s58, 1
          %s128 = smul.addr %s127, 8
          %s129 = scalar_lea.vmem [#allocation4], %s128
          %s130 = smul.u32 2, %s20
          %s132 = ssub.s32 128, 128
          %133 = vsyncadd %s126, %s132
          %s134 = smul.addr %s130, 2
          %s135 = sadd.s32 %s21, %s134
          %s136 = smul.addr %s135, 64
          %s137 = scalar_lea.hbm %s1, %s136
          %s138 = sshll.u32 %s129, 4
          %s139 = int_to_ptr.vmem [resolvable:$true] %s138
          %144 = dma.hbm_to_vmem [thread:$0]  %s137, 128, %s139, %s126, 128, 64, 4
        $region24: #{tpu_custom_call.1} parent=19 // pred_fallthru
          _
      $region20: #{tpu_custom_call.1} parent=5 // pred_fallthru
        _
      %p145 = scmp.le.s32.totalorder 1, %s13
      %p146 = scmp.lt.s32.totalorder %s13, 3
      %p147 = pnand %p145, %p146
      %p148 = pneg %p147
      // Predicated region
      $region25: #{tpu_custom_call.1} parent=5 // pred_check
        _
      $region26: #{tpu_custom_call.1} parent=5 // pred_check_branch
        %150 = sbr.rel (%p147) target = $region28
      $region27: #{tpu_custom_call.1} parent=5 // pred_region
        %s151 = ssub.s32 %s13, 1
        %s152 = sand.u32 %s61, 1
        %s153 = scalar_lea.sflag [#allocation5], %s152
        %s154 = sand.u32 %s61, 1
        %s155 = smul.addr %s154, 8
        %s156 = scalar_lea.vmem [#allocation4], %s155
        // Predicated region
        $region29: #{tpu_custom_call.1} parent=27 // pred_check
          %p157 = pneg %p74
        $region30: #{tpu_custom_call.1} parent=27 // pred_check_branch
          %159 = sbr.rel (%p157) target = $region32
        $region31: #{tpu_custom_call.1} parent=27 // pred_region
          %160 = dma.done %s153, 128
        $region32: #{tpu_custom_call.1} parent=27 // pred_fallthru
          _
        %p161 = pneg %p46
        %p162 = pneg %p43
        %s163 = sand.u32 %s61, 1
        %s164 = scalar_lea.sflag [#allocation5], %s163
        %s165 = sand.u32 %s61, 1
        %s166 = smul.addr %s165, 8
        %s167 = scalar_lea.vmem [#allocation4], %s166
        %p168 = pneg %p74
        %p169 = pneg %p71
        %p170 = pneg %p100
        %p171 = pneg %p97
        %s172 = smul.u32 2, %s22
        %p173 = scmp.eq.s32.totalorder %s23, 0
        // Predicated region
        $region33: #{tpu_custom_call.1} parent=27 // pred_check
          %p174 = pneg %p173
        $region34: #{tpu_custom_call.1} parent=27 // pred_check_branch
          %176 = sbr.rel (%p174) target = $region36
        $region35: #{tpu_custom_call.1} parent=27 // pred_region
          %vm177 = vcmask 25600
          %178 = vst.msk [vmem:[#allocation2] sm:$0x3] %vm177, 0.0
        $region36: #{tpu_custom_call.1} parent=27 // pred_fallthru
          _
        %s179 = sld [smem:[#allocation3]]
        %v180 = vld [vmem:[%s156] sm:$0xf]
        %v181 = vld [vmem:[%s156 + $0x4] sm:$0xf]
        %v182 = vmax.f32 %v180, 1e-06
        %v183 = vmax.f32 %v181, 1e-06
        %v184 = vlog2.pop %v182
        %v185 = vmul.f32 %v184, 0.6931472
        %v186 = vlog2.pop %v183
        %v187 = vmul.f32 %v186, 0.6931472
        %v188 = vstv %s179
        %v189 = vmul.f32 %v188, %v185
        %v190 = vmul.f32 %v188, %v187
        %v191 = vmul.f32 %v189, 1.442695
        %v192 = vpow.pop %v191
        %v193 = vmul.f32 %v190, 1.442695
        %v194 = vpow.pop %v193
        %v195 = vld [vmem:[#allocation2] sm:$0x3]
        %vm196 = vcmask 1043456
        %v197 = vsel %vm196, %v192, 0.0
        %198 = vadd.xlane.f32.xlu0 %v197
        %v199 = vpop.xlane.xlu0 %198
        %v200 = vsel %vm196, %v194, 0.0
        %201 = vadd.xlane.f32.xlu0 %v200
        %v202 = vpop.xlane.xlu0 %201
        %v205 = vlaneseq
        %v206 = vand.u32 %v205, 127
        %v207 = vlaneseq
        %v208 = vshrl.u32 %v207, 7
        %v209 = vsub.s32 %v206, %v208
        %v210 = vrot.slane %v199, %v209
        %v211 = vlaneseq
        %v212 = vshrl.u32 %v211, 7
        %v213 = vsub.s32 %v206, %v212
        %v214 = vrot.slane %v202, %v213
        %vm215 = vcmask 1041409
        %v216 = vsel %vm215, %v214, %v210
        %v218 = vadd.f32 %v195, %v216
        %vm219 = vcmask 25600
        %220 = vst.msk [vmem:[#allocation2] sm:$0x3] %vm219, %v218
        %p221 = scmp.eq.s32.totalorder %s23, 1
        // Predicated region
        $region37: #{tpu_custom_call.1} parent=27 // pred_check
          %p222 = pneg %p221
        $region38: #{tpu_custom_call.1} parent=27 // pred_check_branch
          %224 = sbr.rel (%p222) target = $region40
        $region39: #{tpu_custom_call.1} parent=27 // pred_region
          %v225 = vld [vmem:[#allocation2] sm:$0x3]
          %v226 = vmul.f32 %v225, 0.00390625
          %v227 = vlog2.pop %v226
          %v228 = vmul.f32 %v227, 0.6931472
          %v229 = vrcp.pop %v188
          %v230 = vmul.f32 %v228, %v229
          %v231 = vmul.f32 %v230, 1.442695
          %v232 = vpow.pop %v231
          %v233 = vmul.f32 %v232, %v232
          %v234 = vsel %vm219, %v233, 0.0
          %235 = vadd.xlane.f32.xlu0 %v234
          %v236 = vpop.xlane.xlu0 %235
          %v237 = vrsqrt.pop %v236
          %v238 = vmul.f32 %v236, %v237
          %vm239 = vcmp.eq.f32.partialorder %v236, inf
          %v240 = vsel %vm239, %v236, %v238
          %vm241 = vcmp.eq.f32.partialorder %v236, 0.0
          %v242 = vand.u32 %v236, 2147483648
          %v243 = vsel %vm241, %v242, %v240
          %v244 = vadd.f32 %v243, 1e-06
          %v245 = vrcp.pop %v244
          %v246 = vmul.f32 %v232, %v245
          %247 = vst.msk [vmem:[#allocation7] sm:$0x3] %vm219, %v246
        $region40: #{tpu_custom_call.1} parent=27 // pred_fallthru
          _
        // Predicated region
        $region41: #{tpu_custom_call.1} parent=27 // pred_check
          %p248 = pneg %p97
        $region42: #{tpu_custom_call.1} parent=27 // pred_check_branch
          %250 = sbr.rel (%p248) target = $region44
        $region43: #{tpu_custom_call.1} parent=27 // pred_region
          %s252 = ssub.s32 32, 32
          %253 = vsyncadd [#allocation6], %s252
          %s254 = smul.addr %s22, 32
          %s255 = scalar_lea.hbm %s2, %s254
          %s257 = sshll.u32 [#allocation7], 4
          %s258 = int_to_ptr.vmem [resolvable:$true] %s257
          %260 = dma.vmem_to_hbm [thread:$0]  %s258, 32, %s255, [#allocation6]
        $region44: #{tpu_custom_call.1} parent=27 // pred_fallthru
          _
        // Predicated region
        $region45: #{tpu_custom_call.1} parent=27 // pred_check
          %p261 = pneg %p97
        $region46: #{tpu_custom_call.1} parent=27 // pred_check_branch
          %263 = sbr.rel (%p261) target = $region48
        $region47: #{tpu_custom_call.1} parent=27 // pred_region
          %264 = dma.done [#allocation6], 32
        $region48: #{tpu_custom_call.1} parent=27 // pred_fallthru
          _
      $region28: #{tpu_custom_call.1} parent=5 // pred_fallthru
        _
      %p265 = scmp.le.s32.totalorder 2, %s13
      // Predicated region
      $region49: #{tpu_custom_call.1} parent=5 // pred_check
        %p266 = pneg %p265
      $region50: #{tpu_custom_call.1} parent=5 // pred_check_branch
        %268 = sbr.rel (%p266) target = $region52
      $region51: #{tpu_custom_call.1} parent=5 // pred_region
        %s269 = ssub.s32 %s13, 2
      $region52: #{tpu_custom_call.1} parent=5 // pred_fallthru
        _
    $region6: #{tpu_custom_call.1} parent=1 // loop_footer
      %s17 = sadd.s32 1, %s13
    $region7: #{tpu_custom_call.1} parent=1 // loop_footer_branch
      %12 = sbr.rel target = $region3
    $region8: #{tpu_custom_call.1} parent=1 // loop_exit
      _
    %270 = vsyncpa [#allocation5], 1
    %s271 = scalar_lea.sflag [#allocation5], 1
    %272 = vsyncpa %s271, 1
    %273 = vsyncpa [#allocation6], 1
    %s274 = scalar_lea.sflag [#allocation6], 1
    %275 = vsyncpa %s274, 1

</llo_original>
